<compile_context>
chip_gen: v6e
topology: v6e:2x2x1
jax: 0.10.0
libtpu: 0.0.40
codegen_flags: <defaults>
</compile_context>

<pallas_src>
import functools

import jax
import jax.numpy as jnp
from jax import lax
from jax.experimental import pallas as pl
from jax.experimental.pallas import tpu as pltpu

LN_EPS = 1e-5


def _round_up(n, m):
    return ((n + m - 1) // m) * m


def _cdiv(a, b):
    return -(-a // b)


def _ffn_kernel(x_ref, w1_ref, b1_ref, w2_ref, b2_ref, o_ref, *,
                h_chunk, n_chunks):
    """x_ref: (TILE_ROWS, C) tile.  w1 LN-folded (C,H) bf16, w2 (H,C) bf16."""
    # --- LayerNorm statistics in f32 (affine already folded into w1/b1) ---
    x = x_ref[...].astype(jnp.float32)
    mu = jnp.mean(x, axis=-1, keepdims=True)
    xc = x - mu
    var = jnp.mean(xc * xc, axis=-1, keepdims=True)
    xn = (xc * lax.rsqrt(var + LN_EPS)).astype(jnp.bfloat16)

    out_cols = o_ref.shape[-1]

    if n_chunks == 1:
        # --- Linear 1 (bf16 MXU, f32 acc) + bias + swish (f32) ---
        h = jnp.dot(xn, w1_ref[...], preferred_element_type=jnp.float32)
        h = h + b1_ref[...].astype(jnp.float32)
        h = h * jax.nn.sigmoid(h)
        # --- Linear 2 ---
        y = jnp.dot(h.astype(jnp.bfloat16), w2_ref[...],
                    preferred_element_type=jnp.float32)
    else:
        # H-chunked: bounds the live f32 `h` intermediate to tile_rows x h_chunk.
        def body(c, acc):
            off = pl.multiple_of(c * h_chunk, h_chunk)
            hc = jnp.dot(xn, w1_ref[:, pl.ds(off, h_chunk)],
                         preferred_element_type=jnp.float32)
            hc = hc + b1_ref[:, pl.ds(off, h_chunk)].astype(jnp.float32)
            hc = hc * jax.nn.sigmoid(hc)
            return acc + jnp.dot(hc.astype(jnp.bfloat16),
                                 w2_ref[pl.ds(off, h_chunk), :],
                                 preferred_element_type=jnp.float32)

        y = lax.fori_loop(0, n_chunks, body,
                          jnp.zeros((x.shape[0], out_cols), jnp.float32))

    y = y + b2_ref[...].astype(jnp.float32)
    # dropout1 / dropout2: identity in eval mode.
    o_ref[...] = y.astype(o_ref.dtype)


def _vmem_capacity_bytes():
    try:
        return int(pltpu.get_tpu_info().vmem_capacity_bytes)
    except Exception:
        pass
    try:
        kind = jax.devices()[0].device_kind.lower()
        if "v5" in kind or "v6" in kind:
            return 128 * 1024 * 1024
    except Exception:
        pass
    return 64 * 1024 * 1024  # conservative: v7x per-TC VMEM


def _pick_h_chunk(H, tile_rows, h_chunk):
    """Choose a 128-aligned chunk of H that divides H; bound live f32 h ~1MiB."""
    if h_chunk is not None:
        h_chunk = int(h_chunk)
        if h_chunk <= 0 or H % h_chunk != 0 or \
                (h_chunk != H and h_chunk % 128 != 0):
            return H
        return h_chunk
    if H % 128 != 0:
        return H
    target = max(128, (1 * 1024 * 1024) // (4 * max(tile_rows, 8)))
    target = max(128, min(H, (target // 128) * 128))
    while target > 128 and H % target != 0:
        target -= 128
    return target if H % target == 0 else H


def _vmem_estimate(tile_rows, C, H, h_chunk, io_itemsize):
    return int(
        2 * tile_rows * C * io_itemsize          # x double buffer
        + 2 * tile_rows * C * io_itemsize        # o double buffer
        + (C * H + H * C) * 2                    # bf16 weights, single-buffered
        + (H + C) * 4                            # biases, single-buffered
        + tile_rows * C * (4 + 2 + 4)            # x f32, xn bf16, y f32
        + tile_rows * h_chunk * (4 + 2)          # h chunk f32 + bf16
    )


def _const_spec(shape):
    """BlockSpec for a grid-invariant operand; single-buffered if supported."""
    idx = lambda i: (0,) * len(shape)
    try:
        return pl.BlockSpec(shape, idx, pipeline_mode=pl.Buffered(1))
    except TypeError:
        return pl.BlockSpec(shape, idx)


def feed_forward_module(x, params, *, tile_rows=512, h_chunk=None):
    """x: (T, B, C) -> (T, B, C)."""
    T, B, C = x.shape
    H = params["w1"].shape[1]
    rows = T * B
    itemsize = jnp.dtype(x.dtype).itemsize

    # --- Fold LN affine into W1/b1 in f32, THEN cast to the MXU dtype ---
    gamma = params["gamma"].astype(jnp.float32).reshape(C)
    beta = params["beta"].astype(jnp.float32).reshape(C)
    w1_f32 = params["w1"].astype(jnp.float32)
    w1 = (gamma[:, None] * w1_f32).astype(jnp.bfloat16)               # (C, H)
    b1 = params["b1"].astype(jnp.float32).reshape(1, H) + beta @ w1_f32
    w2 = params["w2"].astype(jnp.bfloat16)                            # (H, C)
    b2 = params["b2"].astype(jnp.float32).reshape(1, C)

    # --- Row tiling: multiple of 8, no bigger than rows, >=2 grid steps ---
    tile_rows = max(8, _round_up(min(int(tile_rows), rows), 8))
    if _cdiv(rows, tile_rows) < 2 and rows > 8:
        tile_rows = max(8, _round_up(_cdiv(rows, 2), 8))

    # --- H chunk + generation-aware VMEM budget (shrink tile if needed) ---
    hc = _pick_h_chunk(H, tile_rows, h_chunk)
    vmem_cap = int(0.85 * _vmem_capacity_bytes())
    est = _vmem_estimate(tile_rows, C, H, hc, itemsize)
    while est > vmem_cap and tile_rows > 8:
        tile_rows = max(8, _round_up(tile_rows // 2, 8))
        hc = _pick_h_chunk(H, tile_rows, h_chunk)
        est = _vmem_estimate(tile_rows, C, H, hc, itemsize)
    vmem_limit = int(min(vmem_cap, max(2 * est, 32 * 1024 * 1024)))

    n_chunks = H // hc
    n_blocks = _cdiv(rows, tile_rows)

    x2d = x.reshape(rows, C)
    kernel = functools.partial(_ffn_kernel, h_chunk=hc, n_chunks=n_chunks)

    cost = pl.CostEstimate(
        flops=4 * rows * C * H,                            # two GEMMs
        transcendentals=rows * H,                          # sigmoid
        bytes_accessed=int(2 * rows * C * itemsize         # x in + y out
                           + 2 * C * H * 2                 # bf16 weights
                           + (H + C) * 4),                 # biases
    )

    out2d = pl.pallas_call(
        kernel,
        out_shape=jax.ShapeDtypeStruct((rows, C), x.dtype),
        grid_spec=pltpu.PrefetchScalarGridSpec(
            num_scalar_prefetch=0,
            grid=(n_blocks,),
            in_specs=[
                pl.BlockSpec((tile_rows, C), lambda i: (i, 0)),   # x tile
                _const_spec((C, H)),                              # w1 (LN-folded, bf16)
                _const_spec((1, H)),                              # b1 (LN-folded, f32)
                _const_spec((H, C)),                              # w2 (bf16)
                _const_spec((1, C)),                              # b2 (f32)
            ],
            out_specs=pl.BlockSpec((tile_rows, C), lambda i: (i, 0)),
        ),
        compiler_params=pltpu.CompilerParams(
            dimension_semantics=("parallel",),
            vmem_limit_bytes=vmem_limit,
        ),
        cost_estimate=cost,
    )(x2d, w1, b1, w2, b2)

    return out2d.reshape(T, B, C)


def init_params(key, input_feat, hidden_units, dtype=jnp.float32):
    """Deterministic synthetic parameters matching nn.Linear / LayerNorm shapes."""
    k1, k2, k3, k4 = jax.random.split(key, 4)
    s1 = 1.0 / jnp.sqrt(input_feat)
    s2 = 1.0 / jnp.sqrt(hidden_units)
    return {
        "gamma": jnp.ones((1, input_feat), dtype),
        "beta": jnp.zeros((1, input_feat), dtype),
        # PyTorch stores Linear weight as (out, in); we keep (in, out) for x @ W.
        "w1": jax.random.uniform(k1, (input_feat, hidden_units), dtype,
                                 minval=-1.0, maxval=1.0) * s1,
        "b1": jax.random.uniform(k2, (1, hidden_units), dtype,
                                 minval=-1.0, maxval=1.0) * s1,
        "w2": jax.random.uniform(k3, (hidden_units, input_feat), dtype,
                                 minval=-1.0, maxval=1.0) * s2,
        "b2": jax.random.uniform(k4, (1, input_feat), dtype,
                                 minval=-1.0, maxval=1.0) * s2,
    }


if __name__ == "__main__":
    # Small, lane-friendly shapes: seq=24, batch=3, input_feat=128, hidden=256.
    T, B, C, H = 24, 3, 128, 256

    key = jax.random.PRNGKey(0)
    kx, kp = jax.random.split(key)
    x = jax.random.normal(kx, (T, B, C), jnp.float32)
    params = init_params(kp, C, H)

    # --- Reference: pure f32 math (module semantics) ---
    x32 = x.astype(jnp.float32)
    mu = jnp.mean(x32, axis=-1, keepdims=True)
    var = jnp.mean((x32 - mu) ** 2, axis=-1, keepdims=True)
    xn_aff = ((x32 - mu) * jax.lax.rsqrt(var + LN_EPS)
              * params["gamma"].reshape(C) + params["beta"].reshape(C))
    h32 = xn_aff.reshape(-1, C) @ params["w1"] + params["b1"].reshape(H)
    h32 = h32 * jax.nn.sigmoid(h32)
    ref32 = (h32 @ params["w2"] + params["b2"].reshape(C)).reshape(T, B, C)

    # --- Reference: bf16-matched, same folded-weight recipe as the kernel ---
    w1_eff = (params["gamma"].reshape(C, 1) * params["w1"]).astype(jnp.bfloat16)
    b1_eff = params["b1"].reshape(1, H) + params["beta"].reshape(1, C) @ params["w1"]
    xn0 = ((x32 - mu) * jax.lax.rsqrt(var + LN_EPS)).astype(jnp.bfloat16).reshape(-1, C)
    h_bf = jnp.dot(xn0, w1_eff, preferred_element_type=jnp.float32) + b1_eff
    h_bf = h_bf * jax.nn.sigmoid(h_bf)
    ref_bf = (jnp.dot(h_bf.astype(jnp.bfloat16), params["w2"].astype(jnp.bfloat16),
                      preferred_element_type=jnp.float32)
              + params["b2"].reshape(1, C)).reshape(T, B, C)

    # Path 1: auto tiling (rows=72 -> 2 ragged row blocks, single H chunk).
    y1 = jax.block_until_ready(feed_forward_module(x, params))
    assert y1.shape == (T, B, C)
    assert jnp.allclose(y1, ref_bf, atol=1e-2, rtol=1e-2), \
        "mismatch vs bf16-matched reference (path 1)"
    assert jnp.allclose(y1, ref32, atol=5e-2, rtol=5e-2), \
        "mismatch vs f32 reference (path 1)"

    # Path 2: small row tile + explicit H chunking (exercises the fori_loop
    # chunked body and the ragged last block: 72 rows -> 3 blocks of 32).
    y2 = jax.block_until_ready(
        feed_forward_module(x, params, tile_rows=32, h_chunk=128))
    assert jnp.allclose(y2, ref_bf, atol=1e-2, rtol=1e-2), \
        "mismatch vs bf16-matched reference (path 2)"
    assert jnp.allclose(y2, ref32, atol=5e-2, rtol=5e-2), \
        "mismatch vs f32 reference (path 2)"
    assert jnp.allclose(y1, y2, atol=2e-2, rtol=2e-2), \
        "chunked and unchunked kernel paths disagree"

    print("KERNEL_OK")
</pallas_src>

<mosaic_0001>
module attributes {stable_mosaic.version = 11 : i64} {
  func.func @_ffn_kernel(%arg0: i32, %arg1: memref<40x128xf32, #tpu.memory_space<vmem>>, %arg2: memref<128x256xbf16, #tpu.memory_space<vmem>>, %arg3: memref<1x256xf32, #tpu.memory_space<vmem>>, %arg4: memref<256x128xbf16, #tpu.memory_space<vmem>>, %arg5: memref<1x128xf32, #tpu.memory_space<vmem>>, %arg6: memref<40x128xf32, #tpu.memory_space<vmem>>) attributes {dimension_semantics = [#tpu.dimension_semantics<parallel>], iteration_bounds = array<i64: 2>, scalar_prefetch = 0 : i64, scratch_operands = 0 : i64, tpu.core_type = #tpu.core_type<tc>, window_params = [{transform_indices = @transform_0, window_bounds = array<i64: 40, 128>}, {pipeline_mode = #tpu.pipeline_mode<synchronous>, transform_indices = @transform_1, window_bounds = array<i64: 128, 256>}, {pipeline_mode = #tpu.pipeline_mode<synchronous>, transform_indices = @transform_2, window_bounds = array<i64: 1, 256>}, {pipeline_mode = #tpu.pipeline_mode<synchronous>, transform_indices = @transform_3, window_bounds = array<i64: 256, 128>}, {pipeline_mode = #tpu.pipeline_mode<synchronous>, transform_indices = @transform_4, window_bounds = array<i64: 1, 128>}, {transform_indices = @transform_5, window_bounds = array<i64: 40, 128>}]} {
    %c0 = arith.constant 0 : index
    %c0_0 = arith.constant 0 : index
    %0 = vector.load %arg1[%c0, %c0_0] : memref<40x128xf32, #tpu.memory_space<vmem>>, vector<40x128xf32>
    %cst = arith.constant dense<0.000000e+00> : vector<40xf32>
    %1 = vector.multi_reduction <add>, %0, %cst [1] : vector<40x128xf32> to vector<40xf32>
    %2 = vector.shape_cast %1 : vector<40xf32> to vector<40x1xf32>
    %cst_1 = arith.constant 1.280000e+02 : f32
    %3 = vector.broadcast %cst_1 : f32 to vector<40x1xf32>
    %4 = arith.divf %2, %3 : vector<40x1xf32>
    %5 = vector.broadcast %4 : vector<40x1xf32> to vector<40x128xf32>
    %6 = arith.subf %0, %5 : vector<40x128xf32>
    %7 = arith.mulf %6, %6 : vector<40x128xf32>
    %cst_2 = arith.constant dense<0.000000e+00> : vector<40xf32>
    %8 = vector.multi_reduction <add>, %7, %cst_2 [1] : vector<40x128xf32> to vector<40xf32>
    %9 = vector.shape_cast %8 : vector<40xf32> to vector<40x1xf32>
    %cst_3 = arith.constant 1.280000e+02 : f32
    %10 = vector.broadcast %cst_3 : f32 to vector<40x1xf32>
    %11 = arith.divf %9, %10 : vector<40x1xf32>
    %cst_4 = arith.constant 9.99999974E-6 : f32
    %12 = vector.broadcast %cst_4 : f32 to vector<40x1xf32>
    %13 = arith.addf %11, %12 : vector<40x1xf32>
    %14 = math.rsqrt %13 : vector<40x1xf32>
    %15 = vector.broadcast %14 : vector<40x1xf32> to vector<40x128xf32>
    %16 = arith.mulf %6, %15 : vector<40x128xf32>
    %17 = arith.truncf %16 : vector<40x128xf32> to vector<40x128xbf16>
    %c0_5 = arith.constant 0 : index
    %c0_6 = arith.constant 0 : index
    %18 = vector.load %arg2[%c0_5, %c0_6] : memref<128x256xbf16, #tpu.memory_space<vmem>>, vector<128x256xbf16>
    %cst_7 = arith.constant dense<0.000000e+00> : vector<40x256xf32>
    %19 = tpu.matmul %17, %18, %cst_7 {dimension_numbers = #tpu.dot_dimension_numbers<[1], [0], [0], [1], [0, 0, 1, 1], [], []>} : vector<40x128xbf16>, vector<128x256xbf16>, vector<40x256xf32> -> vector<40x256xf32>
    %c0_8 = arith.constant 0 : index
    %c0_9 = arith.constant 0 : index
    %20 = vector.load %arg3[%c0_8, %c0_9] : memref<1x256xf32, #tpu.memory_space<vmem>>, vector<1x256xf32>
    %21 = vector.broadcast %20 : vector<1x256xf32> to vector<40x256xf32>
    %22 = arith.addf %19, %21 : vector<40x256xf32>
    %23 = arith.negf %22 : vector<40x256xf32>
    %24 = math.exp %23 : vector<40x256xf32>
    %cst_10 = arith.constant 1.000000e+00 : f32
    %25 = vector.broadcast %cst_10 : f32 to vector<40x256xf32>
    %26 = arith.addf %25, %24 : vector<40x256xf32>
    %27 = arith.divf %25, %26 : vector<40x256xf32>
    %28 = arith.mulf %22, %27 : vector<40x256xf32>
    %29 = arith.truncf %28 : vector<40x256xf32> to vector<40x256xbf16>
    %c0_11 = arith.constant 0 : index
    %c0_12 = arith.constant 0 : index
    %30 = vector.load %arg4[%c0_11, %c0_12] : memref<256x128xbf16, #tpu.memory_space<vmem>>, vector<256x128xbf16>
    %cst_13 = arith.constant dense<0.000000e+00> : vector<40x128xf32>
    %31 = tpu.matmul %29, %30, %cst_13 {dimension_numbers = #tpu.dot_dimension_numbers<[1], [0], [0], [1], [0, 0, 1, 1], [], []>} : vector<40x256xbf16>, vector<256x128xbf16>, vector<40x128xf32> -> vector<40x128xf32>
    %c0_14 = arith.constant 0 : index
    %c0_15 = arith.constant 0 : index
    %32 = vector.load %arg5[%c0_14, %c0_15] : memref<1x128xf32, #tpu.memory_space<vmem>>, vector<1x128xf32>
    %33 = vector.broadcast %32 : vector<1x128xf32> to vector<40x128xf32>
    %34 = arith.addf %31, %33 : vector<40x128xf32>
    %c0_16 = arith.constant 0 : index
    %c0_17 = arith.constant 0 : index
    %35 = vector.load %arg6[%c0_16, %c0_17] : memref<40x128xf32, #tpu.memory_space<vmem>>, vector<40x128xf32>
    tpu.vector_store %arg6[%c0_16, %c0_17], %34 {strides = array<i32>} : memref<40x128xf32, #tpu.memory_space<vmem>>, vector<40x128xf32>,
    return
  }
  func.func @transform_0(%arg0: i32) -> (i32, i32) {
    %c0_i32 = arith.constant 0 : i32
    %c0_i32_0 = arith.constant 0 : i32
    return %arg0, %c0_i32 : i32, i32
  }
  func.func @transform_1(%arg0: i32) -> (i32, i32) {
    %c0_i32 = arith.constant 0 : i32
    %c0_i32_0 = arith.constant 0 : i32
    %c0_i32_1 = arith.constant 0 : i32
    return %c0_i32, %c0_i32_0 : i32, i32
  }
  func.func @transform_2(%arg0: i32) -> (i32, i32) {
    %c0_i32 = arith.constant 0 : i32
    %c0_i32_0 = arith.constant 0 : i32
    %c0_i32_1 = arith.constant 0 : i32
    return %c0_i32, %c0_i32_0 : i32, i32
  }
  func.func @transform_3(%arg0: i32) -> (i32, i32) {
    %c0_i32 = arith.constant 0 : i32
    %c0_i32_0 = arith.constant 0 : i32
    %c0_i32_1 = arith.constant 0 : i32
    return %c0_i32, %c0_i32_0 : i32, i32
  }
  func.func @transform_4(%arg0: i32) -> (i32, i32) {
    %c0_i32 = arith.constant 0 : i32
    %c0_i32_0 = arith.constant 0 : i32
    %c0_i32_1 = arith.constant 0 : i32
    return %c0_i32, %c0_i32_0 : i32, i32
  }
  func.func @transform_5(%arg0: i32) -> (i32, i32) {
    %c0_i32 = arith.constant 0 : i32
    %c0_i32_0 = arith.constant 0 : i32
    return %arg0, %c0_i32 : i32, i32
  }
}

</mosaic_0001>

<llo_original>
// kernel: tpu_custom_call.1
$region0: #{tpu_custom_call.1}
  #allocation0 [shape = 'u32[]', space=smem, size = 0x4, offset = 0x4, fixed_abs, tag = 'smem constant byte address 0x4 - core index']
  #allocation1 [shape = 'u32[144,128]{1,0:T(1,128)}', space=vmem, size = 0x12000, scoped, tag = 'internal scratch']
  %s0 = inlined_call_operand.hbm [shape: f32[72,128], index: 0, kind: input, shape index: {}]
  %s1 = inlined_call_operand.hbm [shape: bf16[128,256], index: 1, kind: input, shape index: {}]
  %s2 = inlined_call_operand.vmem [shape: f32[1,256], index: 2, kind: input, shape index: {}]
  %s3 = inlined_call_operand.hbm [shape: bf16[256,128], index: 3, kind: input, shape index: {}]
  %s4 = inlined_call_operand.vmem [shape: f32[1,128], index: 4, kind: input, shape index: {}]
  %s5 = inlined_call_operand.hbm [shape: f32[72,128], index: 5, kind: output, shape index: {}]
  %s6 = sld [smem:[#allocation0]]
  $region65: #{tpu_custom_call.1} parent=0
    _
  %s8 = ssub.s32 1, %s6
  %s9 = scalar_select 0, %s8, %s6
  $region1: #{tpu_custom_call.1} parent=0
    #allocation2 [shape = 'u8[40960]{0}', space=vmem, size = 0xa000, scoped, tag = 'input window, operand 0']
    #allocation3 [shape = 's32[2]{0}', space=sflag, size = 0x8, scoped, tag = 'scoped memory for tpu_custom_call.1']
    #allocation4 [shape = 's32[2]{0}', space=sflag, size = 0x8, scoped, tag = 'scoped memory for tpu_custom_call.1']
    #allocation5 [shape = 'u8[65536]{0}', space=vmem, size = 0x10000, scoped, tag = 'input window, operand 1, single buffered']
    #allocation6 [shape = 's32[1]{0}', space=sflag, size = 0x4, scoped, tag = 'scoped memory for tpu_custom_call.1']
    #allocation7 [shape = 'u8[65536]{0}', space=vmem, size = 0x10000, scoped, tag = 'input window, operand 3, single buffered']
    #allocation8 [shape = 'u8[40960]{0}', space=vmem, size = 0xa000, scoped, tag = 'output window, operand 0']
    %10 = vsyncpa [#allocation3], 0
    %s11 = scalar_lea.sflag [#allocation3], 1
    %12 = vsyncpa %s11, 0
    %13 = vsyncpa [#allocation6], 0
    %14 = vsyncpa [#allocation4], 0
    %s15 = scalar_lea.sflag [#allocation4], 1
    %16 = vsyncpa %s15, 0
    loop: start=0, step=1, limit=4
    $region2: #{tpu_custom_call.1} parent=1 // loop_pre_header
      _
    $region3: #{tpu_custom_call.1} parent=1 // loop_header
      %s18 = sphi 0, %s22
      %p19 = scmp.ge.s32.totalorder %s18, 4
      %s28 = sphi 0, %s30
      %s31 = sphi 0, %s28
      %s32 = sphi 0, %s31
      %s48 = sphi 0, %s32
      %s52 = sphi 0, %s52
      %s54 = sphi 0, %s52
      %s55 = sphi 0, %s54
      %s69 = sphi 0, %s55
      %s73 = sphi 0, %s73
      %s75 = sphi 0, %s73
      %s76 = sphi 0, %s75
      %s90 = sphi 0, %s76
      %s94 = sphi 0, %s94
      %s96 = sphi 0, %s94
      %s97 = sphi 0, %s96
      %s111 = sphi 0, %s97
      %s115 = sphi 0, %s115
      %s117 = sphi 0, %s115
      %s118 = sphi 0, %s117
      %s132 = sphi 0, %s118
      %s138 = sphi 0, %s140
      %s141 = sphi 0, %s138
      %s142 = sphi 0, %s141
      %s158 = sphi 0, %s142
    $region4: #{tpu_custom_call.1} parent=1 // loop_header_branch
      %21 = sbr.rel (%p19) target = $region8
    $region5: #{tpu_custom_call.1} parent=1 // loop_body
      %s23 = ssub.s32 %s18, 1
      %s24 = ssub.s32 %s18, 2
      %s25 = sadd.s32 %s18, 1
      %s26 = ssub.s32 %s18, %s25
      %p27 = scmp.eq.s32.totalorder %s26, 0
      %s29 = sadd.s32 %s28, 1
      %s30 = scalar_select %p27, %s28, %s29
      %p33 = pneg %p27
      %p34 = scmp.eq.s32.totalorder %s18, 1
      %p35 = por %p33, %p34
      %p36 = scmp.ne.s32.totalorder %s28, %s31
      %p37 = scmp.eq.s32.totalorder %s18, 0
      %p38 = por %p36, %p37
      %p39 = scmp.ne.s32.totalorder %s28, %s31
      %p40 = scmp.eq.s32.totalorder %s23, 1
      %p41 = por %p39, %p40
      %p42 = scmp.ne.s32.totalorder %s31, %s32
      %p43 = scmp.eq.s32.totalorder %s23, 0
      %p44 = por %p42, %p43
      %p45 = scmp.ne.s32.totalorder %s31, %s32
      %p46 = scmp.eq.s32.totalorder %s24, 1
      %p47 = por %p45, %p46
      %p49 = scmp.ne.s32.totalorder %s32, %s48
      %p50 = scmp.eq.s32.totalorder %s24, 0
      %p51 = por %p49, %p50
      %s53 = sadd.s32 %s52, 1
      %p56 = scmp.eq.s32.totalorder %s18, 1
      %p57 = scmp.ne.s32.totalorder %s52, %s54
      %p58 = scmp.eq.s32.totalorder %s18, 0
      %p59 = por %p57, %p58
      %p60 = scmp.ne.s32.totalorder %s52, %s54
      %p61 = scmp.eq.s32.totalorder %s23, 1
      %p62 = por %p60, %p61
      %p63 = scmp.ne.s32.totalorder %s54, %s55
      %p64 = scmp.eq.s32.totalorder %s23, 0
      %p65 = por %p63, %p64
      %p66 = scmp.ne.s32.totalorder %s54, %s55
      %p67 = scmp.eq.s32.totalorder %s24, 1
      %p68 = por %p66, %p67
      %p70 = scmp.ne.s32.totalorder %s55, %s69
      %p71 = scmp.eq.s32.totalorder %s24, 0
      %p72 = por %p70, %p71
      %s74 = sadd.s32 %s73, 1
      %p77 = scmp.eq.s32.totalorder %s18, 1
      %p78 = scmp.ne.s32.totalorder %s73, %s75
      %p79 = scmp.eq.s32.totalorder %s18, 0
      %p80 = por %p78, %p79
      %p81 = scmp.ne.s32.totalorder %s73, %s75
      %p82 = scmp.eq.s32.totalorder %s23, 1
      %p83 = por %p81, %p82
      %p84 = scmp.ne.s32.totalorder %s75, %s76
      %p85 = scmp.eq.s32.totalorder %s23, 0
      %p86 = por %p84, %p85
      %p87 = scmp.ne.s32.totalorder %s75, %s76
      %p88 = scmp.eq.s32.totalorder %s24, 1
      %p89 = por %p87, %p88
      %p91 = scmp.ne.s32.totalorder %s76, %s90
      %p92 = scmp.eq.s32.totalorder %s24, 0
      %p93 = por %p91, %p92
      %s95 = sadd.s32 %s94, 1
      %p98 = scmp.eq.s32.totalorder %s18, 1
      %p99 = scmp.ne.s32.totalorder %s94, %s96
      %p100 = scmp.eq.s32.totalorder %s18, 0
      %p101 = por %p99, %p100
      %p102 = scmp.ne.s32.totalorder %s94, %s96
      %p103 = scmp.eq.s32.totalorder %s23, 1
      %p104 = por %p102, %p103
      %p105 = scmp.ne.s32.totalorder %s96, %s97
      %p106 = scmp.eq.s32.totalorder %s23, 0
      %p107 = por %p105, %p106
      %p108 = scmp.ne.s32.totalorder %s96, %s97
      %p109 = scmp.eq.s32.totalorder %s24, 1
      %p110 = por %p108, %p109
      %p112 = scmp.ne.s32.totalorder %s97, %s111
      %p113 = scmp.eq.s32.totalorder %s24, 0
      %p114 = por %p112, %p113
      %s116 = sadd.s32 %s115, 1
      %p119 = scmp.eq.s32.totalorder %s18, 1
      %p120 = scmp.ne.s32.totalorder %s115, %s117
      %p121 = scmp.eq.s32.totalorder %s18, 0
      %p122 = por %p120, %p121
      %p123 = scmp.ne.s32.totalorder %s115, %s117
      %p124 = scmp.eq.s32.totalorder %s23, 1
      %p125 = por %p123, %p124
      %p126 = scmp.ne.s32.totalorder %s117, %s118
      %p127 = scmp.eq.s32.totalorder %s23, 0
      %p128 = por %p126, %p127
      %p129 = scmp.ne.s32.totalorder %s117, %s118
      %p130 = scmp.eq.s32.totalorder %s24, 1
      %p131 = por %p129, %p130
      %p133 = scmp.ne.s32.totalorder %s118, %s132
      %p134 = scmp.eq.s32.totalorder %s24, 0
      %p135 = por %p133, %p134
      %s136 = ssub.s32 %s18, %s25
      %p137 = scmp.eq.s32.totalorder %s136, 0
      %s139 = sadd.s32 %s138, 1
      %s140 = scalar_select %p137, %s138, %s139
      %p143 = pneg %p137
      %p144 = scmp.eq.s32.totalorder %s18, 1
      %p145 = por %p143, %p144
      %p146 = scmp.ne.s32.totalorder %s138, %s141
      %p147 = scmp.eq.s32.totalorder %s18, 0
      %p148 = por %p146, %p147
      %p149 = scmp.ne.s32.totalorder %s138, %s141
      %p150 = scmp.eq.s32.totalorder %s23, 1
      %p151 = por %p149, %p150
      %p152 = scmp.ne.s32.totalorder %s141, %s142
      %p153 = scmp.eq.s32.totalorder %s23, 0
      %p154 = por %p152, %p153
      %p155 = scmp.ne.s32.totalorder %s141, %s142
      %p156 = scmp.eq.s32.totalorder %s24, 1
      %p157 = por %p155, %p156
      %p159 = scmp.ne.s32.totalorder %s142, %s158
      %p160 = scmp.eq.s32.totalorder %s24, 0
      %p161 = por %p159, %p160
      %p162 = scmp.le.s32.totalorder 1, %s18
      %p163 = scmp.lt.s32.totalorder %s18, 3
      %p164 = pnand %p162, %p163
      %p165 = pneg %p164
      // Predicated region
      $region9: #{tpu_custom_call.1} parent=5 // pred_check
        _
      $region10: #{tpu_custom_call.1} parent=5 // pred_check_branch
        %167 = sbr.rel (%p164) target = $region12
      $region11: #{tpu_custom_call.1} parent=5 // pred_region
        %s168 = ssub.s32 %s18, 1
        // Predicated region
        $region13: #{tpu_custom_call.1} parent=11 // pred_check
          %p169 = pneg %p65
        $region14: #{tpu_custom_call.1} parent=11 // pred_check_branch
          %171 = sbr.rel (%p169) target = $region16
        $region15: #{tpu_custom_call.1} parent=11 // pred_region
          %s173 = ssub.s32 2048, 2048
          %174 = vsyncadd [#allocation6], %s173
          %s175 = sshll.u32 [#allocation5], 4
          %s176 = int_to_ptr.vmem [resolvable:$true] %s175
          %181 = dma.hbm_to_vmem [thread:$0]  %s1, 2048, %s176, [#allocation6], 128, 128, 8
        $region16: #{tpu_custom_call.1} parent=11 // pred_fallthru
          _
        // Predicated region
        $region17: #{tpu_custom_call.1} parent=11 // pred_check
          %p182 = pneg %p86
        $region18: #{tpu_custom_call.1} parent=11 // pred_check_branch
          %184 = sbr.rel (%p182) target = $region20
        $region19: #{tpu_custom_call.1} parent=11 // pred_region
          _
        $region20: #{tpu_custom_call.1} parent=11 // pred_fallthru
          _
        // Predicated region
        $region21: #{tpu_custom_call.1} parent=11 // pred_check
          %p185 = pneg %p107
        $region22: #{tpu_custom_call.1} parent=11 // pred_check_branch
          %187 = sbr.rel (%p185) target = $region24
        $region23: #{tpu_custom_call.1} parent=11 // pred_region
          %s189 = ssub.s32 2048, 2048
          %190 = vsyncadd [#allocation6], %s189
          %s191 = sshll.u32 [#allocation7], 4
          %s192 = int_to_ptr.vmem [resolvable:$true] %s191
          %197 = dma.hbm_to_vmem [thread:$0]  %s3, 2048, %s192, [#allocation6], 64, 64, 4
        $region24: #{tpu_custom_call.1} parent=11 // pred_fallthru
          _
        // Predicated region
        $region25: #{tpu_custom_call.1} parent=11 // pred_check
          %p198 = pneg %p128
        $region26: #{tpu_custom_call.1} parent=11 // pred_check_branch
          %200 = sbr.rel (%p198) target = $region28
        $region27: #{tpu_custom_call.1} parent=11 // pred_region
          _
        $region28: #{tpu_custom_call.1} parent=11 // pred_fallthru
          _
      $region12: #{tpu_custom_call.1} parent=5 // pred_fallthru
        _
      %p201 = scmp.lt.s32.totalorder %s18, 2
      // Predicated region
      $region29: #{tpu_custom_call.1} parent=5 // pred_check
        %p202 = pneg %p201
      $region30: #{tpu_custom_call.1} parent=5 // pred_check_branch
        %204 = sbr.rel (%p202) target = $region32
      $region31: #{tpu_custom_call.1} parent=5 // pred_region
        // Predicated region
        $region33: #{tpu_custom_call.1} parent=31 // pred_check
          %p205 = pneg %p38
        $region34: #{tpu_custom_call.1} parent=31 // pred_check_branch
          %207 = sbr.rel (%p205) target = $region36
        $region35: #{tpu_custom_call.1} parent=31 // pred_region
          %s208 = sand.u32 %s28, 1
          %s209 = scalar_lea.sflag [#allocation3], %s208
          %s210 = sand.u32 %s28, 1
          %s211 = smul.addr %s210, 40
          %s212 = scalar_lea.vmem [#allocation2], %s211
          %s213 = smul.u32 5, %s18
          %s214 = ssub.s32 9, %s213
          %p215 = scmp.lt.s32.totalorder %s214, 5
          %s216 = scalar_select %p215, %s214, 5
          %s217 = smul.u32 128, %s216
          %s219 = ssub.s32 640, %s217
          %220 = vsyncadd %s209, %s219
          %p221 = scmp.ne.s32.totalorder 0, %s217
          %s222 = smul.addr %s213, 128
          %s223 = scalar_lea.hbm %s0, %s222
          %s224 = smul.u32 8, %s216
          %s225 = sshll.u32 %s212, 4
          %s226 = int_to_ptr.vmem [resolvable:$true] %s225
          %s227 = sshll.u32 %s224, 4
          %231 = dma.hbm_to_vmem [thread:$0]  (%p221), %s223, %s227, %s226, %s209, 128, 128, 8
        $region36: #{tpu_custom_call.1} parent=31 // pred_fallthru
          _
      $region32: #{tpu_custom_call.1} parent=5 // pred_fallthru
        _
      %p232 = scmp.le.s32.totalorder 1, %s18
      %p233 = scmp.lt.s32.totalorder %s18, 3
      %p234 = pnand %p232, %p233
      %p235 = pneg %p234
      // Predicated region
      $region37: #{tpu_custom_call.1} parent=5 // pred_check
        _
      $region38: #{tpu_custom_call.1} parent=5 // pred_check_branch
        %237 = sbr.rel (%p234) target = $region40
      $region39: #{tpu_custom_call.1} parent=5 // pred_region
        %s238 = ssub.s32 %s18, 1
        %s239 = sand.u32 %s31, 1
        %s240 = scalar_lea.sflag [#allocation3], %s239
        %s241 = sand.u32 %s31, 1
        %s242 = smul.addr %s241, 40
        %s243 = scalar_lea.vmem [#allocation2], %s242
        // Predicated region
        $region41: #{tpu_custom_call.1} parent=39 // pred_check
          %p244 = pneg %p44
        $region42: #{tpu_custom_call.1} parent=39 // pred_check_branch
          %246 = sbr.rel (%p244) target = $region44
        $region43: #{tpu_custom_call.1} parent=39 // pred_region
          %247 = dma.done %s240, 640
        $region44: #{tpu_custom_call.1} parent=39 // pred_fallthru
          _
        // Predicated region
        $region45: #{tpu_custom_call.1} parent=39 // pred_check
          %p248 = pneg %p65
        $region46: #{tpu_custom_call.1} parent=39 // pred_check_branch
          %250 = sbr.rel (%p248) target = $region48
        $region47: #{tpu_custom_call.1} parent=39 // pred_region
          %251 = dma.done [#allocation6], 2048
        $region48: #{tpu_custom_call.1} parent=39 // pred_fallthru
          _
        // Predicated region
        $region49: #{tpu_custom_call.1} parent=39 // pred_check
          %p252 = pneg %p107
        $region50: #{tpu_custom_call.1} parent=39 // pred_check_branch
          %254 = sbr.rel (%p252) target = $region52
        $region51: #{tpu_custom_call.1} parent=39 // pred_region
          %255 = dma.done [#allocation6], 2048
        $region52: #{tpu_custom_call.1} parent=39 // pred_fallthru
          _
        %s256 = sand.u32 %s31, 1
        %s257 = scalar_lea.sflag [#allocation3], %s256
        %s258 = sand.u32 %s31, 1
        %s259 = smul.addr %s258, 40
        %s260 = scalar_lea.vmem [#allocation2], %s259
        %p261 = pneg %p44
        %p262 = pneg %p41
        %p263 = pneg %p65
        %p264 = pneg %p62
        %p265 = pneg %p86
        %p266 = pneg %p83
        %p267 = pneg %p107
        %p268 = pneg %p104
        %p269 = pneg %p128
        %p270 = pneg %p125
        %p271 = pneg %p154
        %p272 = pneg %p151
        %s273 = sand.u32 %s141, 1
        %s274 = scalar_lea.sflag [#allocation4], %s273
        %s275 = sand.u32 %s141, 1
        %s276 = smul.addr %s275, 40
        %s277 = scalar_lea.vmem [#allocation8], %s276
        %s278 = smul.u32 5, %s23
        %s279 = ssub.s32 9, %s278
        %p280 = scmp.lt.s32.totalorder %s279, 5
        %s281 = scalar_select %p280, %s279, 5
        %s282 = smul.u32 128, %s281
        %s283 = smul.u32 5, %s23
        %s284 = ssub.s32 9, %s283
        %p285 = scmp.lt.s32.totalorder %s284, 5
        %s286 = scalar_select %p285, %s284, 5
        %s287 = smul.u32 128, %s286
        %v289 = vld [vmem:[%s243] sm:$0xff]
        %v290 = vld [vmem:[%s243 + $0x8] sm:$0xff]
        %v291 = vld [vmem:[%s243 + $0x10] sm:$0xff]
        %v292 = vld [vmem:[%s243 + $0x18] sm:$0xff]
        %v293 = vld [vmem:[%s243 + $0x20] sm:$0xff]
        %294 = vadd.xlane.f32.xlu0 %v289
        %v295 = vpop.xlane.xlu0 %294
        %296 = vadd.xlane.f32.xlu0 %v290
        %v297 = vpop.xlane.xlu0 %296
        %298 = vadd.xlane.f32.xlu0 %v291
        %v299 = vpop.xlane.xlu0 %298
        %300 = vadd.xlane.f32.xlu0 %v292
        %v301 = vpop.xlane.xlu0 %300
        %302 = vadd.xlane.f32.xlu0 %v293
        %v303 = vpop.xlane.xlu0 %302
        %v304 = vrcp.pop 128.0
        %v305 = vmul.f32 %v295, %v304
        %v306 = vmul.f32 %v297, %v304
        %v307 = vmul.f32 %v299, %v304
        %v308 = vmul.f32 %v301, %v304
        %v309 = vmul.f32 %v303, %v304
        %v310 = vsub.f32 %v289, %v305
        %v311 = vsub.f32 %v290, %v306
        %v312 = vsub.f32 %v291, %v307
        %v313 = vsub.f32 %v292, %v308
        %v314 = vsub.f32 %v293, %v309
        %v315 = vmul.f32 %v310, %v310
        %v316 = vmul.f32 %v311, %v311
        %v317 = vmul.f32 %v312, %v312
        %v318 = vmul.f32 %v313, %v313
        %v319 = vmul.f32 %v314, %v314
        %320 = vadd.xlane.f32.xlu0 %v315
        %v321 = vpop.xlane.xlu0 %320
        %322 = vadd.xlane.f32.xlu0 %v316
        %v323 = vpop.xlane.xlu0 %322
        %324 = vadd.xlane.f32.xlu0 %v317
        %v325 = vpop.xlane.xlu0 %324
        %326 = vadd.xlane.f32.xlu0 %v318
        %v327 = vpop.xlane.xlu0 %326
        %328 = vadd.xlane.f32.xlu0 %v319
        %v329 = vpop.xlane.xlu0 %328
        %v330 = vmul.f32 %v321, %v304
        %v331 = vmul.f32 %v323, %v304
        %v332 = vmul.f32 %v325, %v304
        %v333 = vmul.f32 %v327, %v304
        %v334 = vmul.f32 %v329, %v304
        %v335 = vadd.f32 %v330, 1e-05
        %v336 = vadd.f32 %v331, 1e-05
        %v337 = vadd.f32 %v332, 1e-05
        %v338 = vadd.f32 %v333, 1e-05
        %v339 = vadd.f32 %v334, 1e-05
        %v340 = vrsqrt.pop %v335
        %v341 = vrsqrt.pop %v336
        %v342 = vrsqrt.pop %v337
        %v343 = vrsqrt.pop %v338
        %v344 = vrsqrt.pop %v339
        %v345 = vmul.f32 %v310, %v340
        %v346 = vmul.f32 %v311, %v341
        %v347 = vmul.f32 %v312, %v342
        %v348 = vmul.f32 %v313, %v343
        %v349 = vmul.f32 %v314, %v344
        %v350 = vpack.c.bf16 %v346, %v345
        %v351 = vpack.c.bf16 %v348, %v347
        %v352 = vpack.c.bf16 %v349, %v349
        %v353 = vld [vmem:[#allocation5] sm:$0xff]
        %v354 = vld [vmem:[#allocation5 + $0x8] sm:$0xff]
        %v355 = vld [vmem:[#allocation5 + $0x10] sm:$0xff]
        %v356 = vld [vmem:[#allocation5 + $0x18] sm:$0xff]
        %v357 = vld [vmem:[#allocation5 + $0x20] sm:$0xff]
        %v358 = vld [vmem:[#allocation5 + $0x28] sm:$0xff]
        %v359 = vld [vmem:[#allocation5 + $0x30] sm:$0xff]
        %v360 = vld [vmem:[#allocation5 + $0x38] sm:$0xff]
        %v361 = vld [vmem:[#allocation5 + $0x40] sm:$0xff]
        %v362 = vld [vmem:[#allocation5 + $0x48] sm:$0xff]
        %v363 = vld [vmem:[#allocation5 + $0x50] sm:$0xff]
        %v364 = vld [vmem:[#allocation5 + $0x58] sm:$0xff]
        %v365 = vld [vmem:[#allocation5 + $0x60] sm:$0xff]
        %v366 = vld [vmem:[#allocation5 + $0x68] sm:$0xff]
        %v367 = vld [vmem:[#allocation5 + $0x70] sm:$0xff]
        %v368 = vld [vmem:[#allocation5 + $0x78] sm:$0xff]
        %v369 = vld [vmem:[%s2] sm:$0x3]
        %v371 = vlaneseq
        %v372 = vshrl.u32 %v371, 7
        %v373 = vsub.s32 0, %v372
        %v374 = vrot.slane %v369, %v373
        %v375 = vlaneseq
        %v376 = vshrl.u32 %v375, 7
        %v377 = vsub.s32 1, %v376
        %v378 = vrot.slane %v369, %v377
        %v397 = vunpack.c.l.b16 %v353
        %v398 = vunpack.c.h.b16 %v353
        %v399 = vunpack.c.l.b16 %v354
        %v400 = vunpack.c.h.b16 %v354
        %v401 = vunpack.c.l.b16 %v355
        %v402 = vunpack.c.h.b16 %v355
        %v403 = vunpack.c.l.b16 %v356
        %v404 = vunpack.c.h.b16 %v356
        %v405 = vunpack.c.l.b16 %v357
        %v406 = vunpack.c.h.b16 %v357
        %v407 = vunpack.c.l.b16 %v358
        %v408 = vunpack.c.h.b16 %v358
        %v409 = vunpack.c.l.b16 %v359
        %v410 = vunpack.c.h.b16 %v359
        %v411 = vunpack.c.l.b16 %v360
        %v412 = vunpack.c.h.b16 %v360
        %v413 = vunpack.c.l.b16 %v361
        %v414 = vunpack.c.h.b16 %v361
        %v415 = vunpack.c.l.b16 %v362
        %v416 = vunpack.c.h.b16 %v362
        %v417 = vunpack.c.l.b16 %v363
        %v418 = vunpack.c.h.b16 %v363
        %v419 = vunpack.c.l.b16 %v364
        %v420 = vunpack.c.h.b16 %v364
        %v421 = vunpack.c.l.b16 %v365
        %v422 = vunpack.c.h.b16 %v365
        %v423 = vunpack.c.l.b16 %v366
        %v424 = vunpack.c.h.b16 %v366
        %v425 = vunpack.c.l.b16 %v367
        %v426 = vunpack.c.h.b16 %v367
        %v427 = vunpack.c.l.b16 %v368
        %v428 = vunpack.c.h.b16 %v368
        %v429 = vpack.c.b16 %v399, %v397
        %v430 = vpack.c.b16 %v400, %v398
        %v431 = vpack.c.b16 %v403, %v401
        %v432 = vpack.c.b16 %v404, %v402
        %v433 = vpack.c.b16 %v407, %v405
        %v434 = vpack.c.b16 %v408, %v406
        %v435 = vpack.c.b16 %v411, %v409
        %v436 = vpack.c.b16 %v412, %v410
        %v437 = vpack.c.b16 %v415, %v413
        %v438 = vpack.c.b16 %v416, %v414
        %v439 = vpack.c.b16 %v419, %v417
        %v440 = vpack.c.b16 %v420, %v418
        %v441 = vpack.c.b16 %v423, %v421
        %v442 = vpack.c.b16 %v424, %v422
        %v443 = vpack.c.b16 %v427, %v425
        %v444 = vpack.c.b16 %v428, %v426
        %461 = vmatprep.subr.bf16.mxu0 %v444
        %462 = vmatpush1.bf16.msra.mxu0 %v443
        %463 = vmatprep.subr.bf16.mxu0 %v442
        %464 = vmatpush1.bf16.msra.mxu0 %v441
        %465 = vmatprep.subr.bf16.mxu0 %v440
        %466 = vmatpush1.bf16.msra.mxu0 %v439
        %467 = vmatprep.subr.bf16.mxu0 %v438
        %468 = vmatpush1.bf16.msra.mxu0 %v437
        %469 = vmatprep.subr.bf16.mxu0 %v436
        %470 = vmatpush1.bf16.msra.mxu0 %v435
        %471 = vmatprep.subr.bf16.mxu0 %v434
        %472 = vmatpush1.bf16.msra.mxu0 %v433
        %473 = vmatprep.subr.bf16.mxu0 %v432
        %474 = vmatpush1.bf16.msra.mxu0 %v431
        %475 = vmatprep.subr.bf16.mxu0 %v430
        %476 = vmatpush1.bf16.msra.mxu0 %v429
        %477 = vmatprep.subr.bf16.mxu0 0
        %478 = vmatpush2.bf16.msra.mxu0 0
        %479 = vmatprep.subr.bf16.mxu0 0
        %480 = vmatpush2.bf16.msra.mxu0 0
        %481 = vmatprep.subr.bf16.mxu0 0
        %482 = vmatpush2.bf16.msra.mxu0 0
        %483 = vmatprep.subr.bf16.mxu0 0
        %484 = vmatpush2.bf16.msra.mxu0 0
        %485 = vmatprep.subr.bf16.mxu0 0
        %486 = vmatpush2.bf16.msra.mxu0 0
        %487 = vmatprep.subr.bf16.mxu0 0
        %488 = vmatpush2.bf16.msra.mxu0 0
        %489 = vmatprep.subr.bf16.mxu0 0
        %490 = vmatpush2.bf16.msra.mxu0 0
        %491 = vmatprep.subr.bf16.mxu0 0
        %492 = vmatpush2.bf16.msra.mxu0 0
        %493 = vmatprep.mubr.bf16.mxu0 0
        %494 = vmatmul.mubr.bf16.gmra.mxu0 %v350
        %v495 = vpop.f32.mrf.mxu0
        %v496 = vadd.f32 %v374, %v495
        %v497 = vpop.f32.mrf.mxu0
        %v498 = vadd.f32 %v378, %v497
        %v499 = vpop.f32.mrf.mxu0
        %v500 = vadd.f32 %v374, %v499
        %v501 = vpop.f32.mrf.mxu0
        %v502 = vadd.f32 %v378, %v501
        %503 = vmatprep.mubr.bf16.mxu0 0
        %504 = vmatmul.mubr.bf16.gmra.mxu0 %v351
        %v505 = vpop.f32.mrf.mxu0
        %v506 = vadd.f32 %v374, %v505
        %v507 = vpop.f32.mrf.mxu0
        %v508 = vadd.f32 %v378, %v507
        %v509 = vpop.f32.mrf.mxu0
        %v510 = vadd.f32 %v374, %v509
        %v511 = vpop.f32.mrf.mxu0
        %v512 = vadd.f32 %v378, %v511
        %513 = vmatprep.mubr.bf16.mxu0 0
        %514 = vmatmul.mubr.bf16.gmra.mxu0 %v352
        %v515 = vpop.f32.mrf.mxu0
        %v516 = vadd.f32 %v374, %v515
        %v517 = vpop.f32.mrf.mxu0
        %v518 = vadd.f32 %v378, %v517
        %v519 = vpop.f32.mrf.mxu0
        %v520 = vpop.f32.mrf.mxu0
        %521 = vdwg.mxu0
        %v522 = vxor.u32 %v496, 2147483648
        %v523 = vxor.u32 %v498, 2147483648
        %v524 = vxor.u32 %v500, 2147483648
        %v525 = vxor.u32 %v502, 2147483648
        %v526 = vxor.u32 %v506, 2147483648
        %v527 = vxor.u32 %v508, 2147483648
        %v528 = vxor.u32 %v510, 2147483648
        %v529 = vxor.u32 %v512, 2147483648
        %v530 = vxor.u32 %v516, 2147483648
        %v531 = vxor.u32 %v518, 2147483648
        %v532 = vmul.f32 %v522, 1.442695
        %v533 = vpow.pop %v532
        %v534 = vmul.f32 %v523, 1.442695
        %v535 = vpow.pop %v534
        %v536 = vmul.f32 %v524, 1.442695
        %v537 = vpow.pop %v536
        %v538 = vmul.f32 %v525, 1.442695
        %v539 = vpow.pop %v538
        %v540 = vmul.f32 %v526, 1.442695
        %v541 = vpow.pop %v540
        %v542 = vmul.f32 %v527, 1.442695
        %v543 = vpow.pop %v542
        %v544 = vmul.f32 %v528, 1.442695
        %v545 = vpow.pop %v544
        %v546 = vmul.f32 %v529, 1.442695
        %v547 = vpow.pop %v546
        %v548 = vmul.f32 %v530, 1.442695
        %v549 = vpow.pop %v548
        %v550 = vmul.f32 %v531, 1.442695
        %v551 = vpow.pop %v550
        %v552 = vadd.f32 %v533, 1.0
        %v553 = vadd.f32 %v535, 1.0
        %v554 = vadd.f32 %v537, 1.0
        %v555 = vadd.f32 %v539, 1.0
        %v556 = vadd.f32 %v541, 1.0
        %v557 = vadd.f32 %v543, 1.0
        %v558 = vadd.f32 %v545, 1.0
        %v559 = vadd.f32 %v547, 1.0
        %v560 = vadd.f32 %v549, 1.0
        %v561 = vadd.f32 %v551, 1.0
        %v562 = vrcp.pop %v552
        %v563 = vmul.f32 1.0, %v562
        %v564 = vrcp.pop %v553
        %v565 = vmul.f32 1.0, %v564
        %v566 = vrcp.pop %v554
        %v567 = vmul.f32 1.0, %v566
        %v568 = vrcp.pop %v555
        %v569 = vmul.f32 1.0, %v568
        %v570 = vrcp.pop %v556
        %v571 = vmul.f32 1.0, %v570
        %v572 = vrcp.pop %v557
        %v573 = vmul.f32 1.0, %v572
        %v574 = vrcp.pop %v558
        %v575 = vmul.f32 1.0, %v574
        %v576 = vrcp.pop %v559
        %v577 = vmul.f32 1.0, %v576
        %v578 = vrcp.pop %v560
        %v579 = vmul.f32 1.0, %v578
        %v580 = vrcp.pop %v561
        %v581 = vmul.f32 1.0, %v580
        %v582 = vmul.f32 %v496, %v563
        %v583 = vmul.f32 %v498, %v565
        %v584 = vmul.f32 %v500, %v567
        %v585 = vmul.f32 %v502, %v569
        %v586 = vmul.f32 %v506, %v571
        %v587 = vmul.f32 %v508, %v573
        %v588 = vmul.f32 %v510, %v575
        %v589 = vmul.f32 %v512, %v577
        %v590 = vmul.f32 %v516, %v579
        %v591 = vmul.f32 %v518, %v581
        %v592 = vpack.c.bf16 %v584, %v582
        %v593 = vpack.c.bf16 %v585, %v583
        %v594 = vpack.c.bf16 %v588, %v586
        %v595 = vpack.c.bf16 %v589, %v587
        %v596 = vpack.c.bf16 %v590, %v590
        %v597 = vpack.c.bf16 %v591, %v591
        %v598 = vld [vmem:[#allocation7] sm:$0xf]
        %v599 = vld [vmem:[#allocation7 + $0x4] sm:$0xf]
        %v600 = vld [vmem:[#allocation7 + $0x8] sm:$0xf]
        %v601 = vld [vmem:[#allocation7 + $0xc] sm:$0xf]
        %v602 = vld [vmem:[#allocation7 + $0x10] sm:$0xf]
        %v603 = vld [vmem:[#allocation7 + $0x14] sm:$0xf]
        %v604 = vld [vmem:[#allocation7 + $0x18] sm:$0xf]
        %v605 = vld [vmem:[#allocation7 + $0x1c] sm:$0xf]
        %v606 = vld [vmem:[#allocation7 + $0x20] sm:$0xf]
        %v607 = vld [vmem:[#allocation7 + $0x24] sm:$0xf]
        %v608 = vld [vmem:[#allocation7 + $0x28] sm:$0xf]
        %v609 = vld [vmem:[#allocation7 + $0x2c] sm:$0xf]
        %v610 = vld [vmem:[#allocation7 + $0x30] sm:$0xf]
        %v611 = vld [vmem:[#allocation7 + $0x34] sm:$0xf]
        %v612 = vld [vmem:[#allocation7 + $0x38] sm:$0xf]
        %v613 = vld [vmem:[#allocation7 + $0x3c] sm:$0xf]
        %v614 = vld [vmem:[#allocation7 + $0x40] sm:$0xf]
        %v615 = vld [vmem:[#allocation7 + $0x44] sm:$0xf]
        %v616 = vld [vmem:[#allocation7 + $0x48] sm:$0xf]
        %v617 = vld [vmem:[#allocation7 + $0x4c] sm:$0xf]
        %v618 = vld [vmem:[#allocation7 + $0x50] sm:$0xf]
        %v619 = vld [vmem:[#allocation7 + $0x54] sm:$0xf]
        %v620 = vld [vmem:[#allocation7 + $0x58] sm:$0xf]
        %v621 = vld [vmem:[#allocation7 + $0x5c] sm:$0xf]
        %v622 = vld [vmem:[#allocation7 + $0x60] sm:$0xf]
        %v623 = vld [vmem:[#allocation7 + $0x64] sm:$0xf]
        %v624 = vld [vmem:[#allocation7 + $0x68] sm:$0xf]
        %v625 = vld [vmem:[#allocation7 + $0x6c] sm:$0xf]
        %v626 = vld [vmem:[#allocation7 + $0x70] sm:$0xf]
        %v627 = vld [vmem:[#allocation7 + $0x74] sm:$0xf]
        %v628 = vld [vmem:[#allocation7 + $0x78] sm:$0xf]
        %v629 = vld [vmem:[#allocation7 + $0x7c] sm:$0xf]
        %v630 = vld [vmem:[%s4] sm:$0x1]
        %v632 = vlaneseq
        %v633 = vshrl.u32 %v632, 7
        %v634 = vsub.s32 0, %v633
        %v635 = vrot.slane %v630, %v634
        %v669 = vunpack.c.l.b16 %v598
        %v670 = vunpack.c.l.b16 %v599
        %v671 = vunpack.c.l.b16 %v600
        %v672 = vunpack.c.l.b16 %v601
        %v673 = vunpack.c.l.b16 %v602
        %v674 = vunpack.c.l.b16 %v603
        %v675 = vunpack.c.l.b16 %v604
        %v676 = vunpack.c.l.b16 %v605
        %v677 = vunpack.c.l.b16 %v606
        %v678 = vunpack.c.l.b16 %v607
        %v679 = vunpack.c.l.b16 %v608
        %v680 = vunpack.c.l.b16 %v609
        %v681 = vunpack.c.l.b16 %v610
        %v682 = vunpack.c.l.b16 %v611
        %v683 = vunpack.c.l.b16 %v612
        %v684 = vunpack.c.l.b16 %v613
        %v685 = vunpack.c.l.b16 %v614
        %v686 = vunpack.c.l.b16 %v615
        %v687 = vunpack.c.l.b16 %v616
        %v688 = vunpack.c.l.b16 %v617
        %v689 = vunpack.c.l.b16 %v618
        %v690 = vunpack.c.l.b16 %v619
        %v691 = vunpack.c.l.b16 %v620
        %v692 = vunpack.c.l.b16 %v621
        %v693 = vunpack.c.l.b16 %v622
        %v694 = vunpack.c.l.b16 %v623
        %v695 = vunpack.c.l.b16 %v624
        %v696 = vunpack.c.l.b16 %v625
        %v697 = vunpack.c.l.b16 %v626
        %v698 = vunpack.c.l.b16 %v627
        %v699 = vunpack.c.l.b16 %v628
        %v700 = vunpack.c.l.b16 %v629
        %v701 = vpack.c.b16 %v670, %v669
        %v702 = vpack.c.b16 %v672, %v671
        %v703 = vpack.c.b16 %v674, %v673
        %v704 = vpack.c.b16 %v676, %v675
        %v705 = vpack.c.b16 %v678, %v677
        %v706 = vpack.c.b16 %v680, %v679
        %v707 = vpack.c.b16 %v682, %v681
        %v708 = vpack.c.b16 %v684, %v683
        %v709 = vpack.c.b16 %v686, %v685
        %v710 = vpack.c.b16 %v688, %v687
        %v711 = vpack.c.b16 %v690, %v689
        %v712 = vpack.c.b16 %v692, %v691
        %v713 = vpack.c.b16 %v694, %v693
        %v714 = vpack.c.b16 %v696, %v695
        %v715 = vpack.c.b16 %v698, %v697
        %v716 = vpack.c.b16 %v700, %v699
        %733 = vmatprep.subr.bf16.mxu0 0
        %734 = vmatpush1.bf16.msra.mxu0 %v708
        %735 = vmatprep.subr.bf16.mxu0 0
        %736 = vmatpush1.bf16.msra.mxu0 %v707
        %737 = vmatprep.subr.bf16.mxu0 0
        %738 = vmatpush1.bf16.msra.mxu0 %v706
        %739 = vmatprep.subr.bf16.mxu0 0
        %740 = vmatpush1.bf16.msra.mxu0 %v705
        %741 = vmatprep.subr.bf16.mxu0 0
        %742 = vmatpush1.bf16.msra.mxu0 %v704
        %743 = vmatprep.subr.bf16.mxu0 0
        %744 = vmatpush1.bf16.msra.mxu0 %v703
        %745 = vmatprep.subr.bf16.mxu0 0
        %746 = vmatpush1.bf16.msra.mxu0 %v702
        %747 = vmatprep.subr.bf16.mxu0 0
        %748 = vmatpush1.bf16.msra.mxu0 %v701
        %749 = vmatprep.subr.bf16.mxu0 0
        %750 = vmatpush2.bf16.msra.mxu0 %v716
        %751 = vmatprep.subr.bf16.mxu0 0
        %752 = vmatpush2.bf16.msra.mxu0 %v715
        %753 = vmatprep.subr.bf16.mxu0 0
        %754 = vmatpush2.bf16.msra.mxu0 %v714
        %755 = vmatprep.subr.bf16.mxu0 0
        %756 = vmatpush2.bf16.msra.mxu0 %v713
        %757 = vmatprep.subr.bf16.mxu0 0
        %758 = vmatpush2.bf16.msra.mxu0 %v712
        %759 = vmatprep.subr.bf16.mxu0 0
        %760 = vmatpush2.bf16.msra.mxu0 %v711
        %761 = vmatprep.subr.bf16.mxu0 0
        %762 = vmatpush2.bf16.msra.mxu0 %v710
        %763 = vmatprep.subr.bf16.mxu0 0
        %764 = vmatpush2.bf16.msra.mxu0 %v709
        %765 = vmatprep.mubr.bf16.mxu0 %v593
        %766 = vmatmul.mubr.bf16.gmra.mxu0 %v592
        %v767 = vpop.f32.mrf.mxu0
        %v768 = vadd.f32 %v635, %v767
        %v769 = vpop.f32.mrf.mxu0
        %v770 = vpop.f32.mrf.mxu0
        %v771 = vadd.f32 %v635, %v770
        %v772 = vpop.f32.mrf.mxu0
        %773 = vmatprep.mubr.bf16.mxu0 %v595
        %774 = vmatmul.mubr.bf16.gmra.mxu0 %v594
        %v775 = vpop.f32.mrf.mxu0
        %v776 = vadd.f32 %v635, %v775
        %v777 = vpop.f32.mrf.mxu0
        %v778 = vpop.f32.mrf.mxu0
        %v779 = vadd.f32 %v635, %v778
        %v780 = vpop.f32.mrf.mxu0
        %781 = vmatprep.mubr.bf16.mxu0 %v597
        %782 = vmatmul.mubr.bf16.gmra.mxu0 %v596
        %v783 = vpop.f32.mrf.mxu0
        %v784 = vadd.f32 %v635, %v783
        %v785 = vpop.f32.mrf.mxu0
        %v786 = vpop.f32.mrf.mxu0
        %v787 = vpop.f32.mrf.mxu0
        %788 = vdwg.mxu0
        %789 = vst [vmem:[%s277] sm:$0xff] %v768
        %790 = vst [vmem:[%s277 + $0x8] sm:$0xff] %v771
        %791 = vst [vmem:[%s277 + $0x10] sm:$0xff] %v776
        %792 = vst [vmem:[%s277 + $0x18] sm:$0xff] %v779
        %793 = vst [vmem:[%s277 + $0x20] sm:$0xff] %v784
        %s794 = sand.u32 %s141, 1
        %s795 = scalar_lea.sflag [#allocation4], %s794
        %s796 = sand.u32 %s141, 1
        %s797 = smul.addr %s796, 40
        %s798 = scalar_lea.vmem [#allocation8], %s797
        // Predicated region
        $region53: #{tpu_custom_call.1} parent=39 // pred_check
          %p799 = pneg %p151
        $region54: #{tpu_custom_call.1} parent=39 // pred_check_branch
          %801 = sbr.rel (%p799) target = $region56
        $region55: #{tpu_custom_call.1} parent=39 // pred_region
          %s802 = smul.u32 5, %s23
          %s803 = ssub.s32 9, %s802
          %p804 = scmp.lt.s32.totalorder %s803, 5
          %s805 = scalar_select %p804, %s803, 5
          %s806 = smul.u32 128, %s805
          %s808 = ssub.s32 640, %s806
          %809 = vsyncadd %s795, %s808
          %p810 = scmp.ne.s32.totalorder 0, %s806
          %s811 = smul.addr %s802, 128
          %s812 = scalar_lea.hbm %s5, %s811
          %s813 = smul.u32 8, %s805
          %s814 = sshll.u32 %s798, 4
          %s815 = int_to_ptr.vmem [resolvable:$true] %s814
          %s816 = sshll.u32 %s813, 4
          %820 = dma.vmem_to_hbm [thread:$0]  (%p810), %s815, %s816, %s812, %s795, 128, 128, 8
        $region56: #{tpu_custom_call.1} parent=39 // pred_fallthru
          _
      $region40: #{tpu_custom_call.1} parent=5 // pred_fallthru
        _
      %p821 = scmp.le.s32.totalorder 2, %s18
      // Predicated region
      $region57: #{tpu_custom_call.1} parent=5 // pred_check
        %p822 = pneg %p821
      $region58: #{tpu_custom_call.1} parent=5 // pred_check_branch
        %824 = sbr.rel (%p822) target = $region60
      $region59: #{tpu_custom_call.1} parent=5 // pred_region
        %s825 = ssub.s32 %s18, 2
        // Predicated region
        $region61: #{tpu_custom_call.1} parent=59 // pred_check
          %p826 = pneg %p157
        $region62: #{tpu_custom_call.1} parent=59 // pred_check_branch
          %828 = sbr.rel (%p826) target = $region64
        $region63: #{tpu_custom_call.1} parent=59 // pred_region
          %s829 = sand.u32 %s142, 1
          %s830 = scalar_lea.sflag [#allocation4], %s829
          %s831 = sand.u32 %s142, 1
          %s832 = smul.addr %s831, 40
          %s833 = scalar_lea.vmem [#allocation8], %s832
          %834 = dma.done %s830, 640
        $region64: #{tpu_custom_call.1} parent=59 // pred_fallthru
          _
      $region60: #{tpu_custom_call.1} parent=5 // pred_fallthru
        _
    $region6: #{tpu_custom_call.1} parent=1 // loop_footer
      %s22 = sadd.s32 1, %s18
    $region7: #{tpu_custom_call.1} parent=1 // loop_footer_branch
      %17 = sbr.rel target = $region3
    $region8: #{tpu_custom_call.1} parent=1 // loop_exit
      _
    %835 = vsyncpa [#allocation3], 1
    %s836 = scalar_lea.sflag [#allocation3], 1
    %837 = vsyncpa %s836, 1
    %838 = vsyncpa [#allocation6], 1
    %839 = vsyncpa [#allocation4], 1
    %s840 = scalar_lea.sflag [#allocation4], 1
    %841 = vsyncpa %s840, 1

</llo_original>
